<compile_context>
chip_gen: v7x
topology: tpu7x:2x2x1
jax: 0.10.0
libtpu: 0.0.40
codegen_flags: <defaults>
</compile_context>

<pallas_src>
import jax
import jax.numpy as jnp
import numpy as np
from jax.experimental import pallas as pl
from jax.experimental.pallas import tpu as pltpu


DEFAULT_TILE_M = 4096          # target batch rows per grid step (lane axis)
VMEM_LIMIT_BYTES = 32 * 1024 * 1024   # above v5e's 16 MiB default, safe on v7x


def _round_up(x, m):
    return (x + m - 1) // m * m


def _choose_tile_m(batch, target=DEFAULT_TILE_M):
    """Pick the batch-tile width (lane axis).

    Large tiles amortize the ~0.35us fixed per-grid-step cost; when more than
    one tile is needed we prefer an even tile count so both v7x TensorCores
    get work under dimension_semantics=("parallel",).
    """
    b128 = _round_up(max(batch, 1), 128)
    if b128 <= target:
        return b128                       # single tile covers the whole batch
    n = pl.cdiv(b128, target)
    if n % 2:                             # prefer an even number of tiles
        n += 1
    return _round_up(pl.cdiv(b128, n), 128)


def _discriminator_kernel(x_ref,
                          w1_ref, b1_ref,
                          w2_ref, b2_ref,
                          w34_ref, b34_ref,
                          out_ref):
    """One batch tile, feature-major layout.

    x_ref  : (dim_pad, TM) bf16  -- batch on the lane axis
    w1_ref : (k, dim_pad)  bf16,  b1_ref : (k, 1)  f32
    w2_ref : (2k, k)       bf16,  b2_ref : (2k, 1) f32
    w34_ref: (2k, 1)       f32 (fused w3 @ w4),  b34_ref: (1, 1) f32
    out_ref: (1, TM)       f32   -- lane-dense probabilities
    """
    # Linear(dim -> k) + LeakyReLU(0.01); bf16 MXU, f32 accumulation.
    h = jnp.dot(w1_ref[...], x_ref[...], preferred_element_type=jnp.float32)
    h = h + b1_ref[...]
    h = jnp.maximum(h, 0.01 * h)

    # Linear(k -> 2k) + LeakyReLU(0.01)
    h = jnp.dot(w2_ref[...], h.astype(jnp.bfloat16),
                preferred_element_type=jnp.float32) + b2_ref[...]
    h = jnp.maximum(h, 0.01 * h)

    # Fused [Linear(2k -> 4k) ; Linear(4k -> 1)] (no activation in between, so
    # the fusion is exact):  logits = (w3 @ w4)^T . h + (b3 @ w4 + b4)
    # VPU multiply + 64-row sublane reduce -- already lane-dense along batch.
    logits = jnp.sum(h * w34_ref[...], axis=0, keepdims=True) + b34_ref[...]

    # Sigmoid (exact; exp on the EUP).
    out_ref[...] = (1.0 / (1.0 + jnp.exp(-logits))).astype(out_ref.dtype)


def prepare_params(params):
    """Transpose weights to (out, in), zero-pad the input feature dim to a
    sublane multiple, fuse the activation-free tail (w3, b3, w4, b4) in f32,
    and cast MXU operands to bf16.  Biases and the fused head stay f32."""
    w1, b1 = params["w1"], params["b1"]      # (dim, k),  (1, k)
    w2, b2 = params["w2"], params["b2"]      # (k, 2k),   (1, 2k)
    w3, b3 = params["w3"], params["b3"]      # (2k, 4k),  (1, 4k)
    w4, b4 = params["w4"], params["b4"]      # (4k, 1),   (1, 1)

    dim, k = w1.shape
    dim_pad = _round_up(dim, 8)

    # Exact fusion of the two activation-free Linears, composed in f32 BEFORE
    # any bf16 rounding.
    w34 = w3.astype(jnp.float32) @ w4.astype(jnp.float32)               # (2k, 1)
    b34 = b3.astype(jnp.float32) @ w4.astype(jnp.float32) + b4          # (1, 1)

    w1p = jnp.zeros((dim_pad, k), jnp.float32).at[:dim, :].set(w1)

    return dict(
        w1t=w1p.T.astype(jnp.bfloat16),                   # (k, dim_pad)
        b1c=b1.reshape(-1, 1).astype(jnp.float32),        # (k, 1)
        w2t=w2.T.astype(jnp.bfloat16),                    # (2k, k)
        b2c=b2.reshape(-1, 1).astype(jnp.float32),        # (2k, 1)
        w34=w34.astype(jnp.float32),                      # (2k, 1)
        b34=b34.reshape(1, 1).astype(jnp.float32),        # (1, 1)
    )


def discriminator_tabular_forward(data, kparams, *, tile_m=None):
    """data: (B, dim) float32.  kparams: output of prepare_params.  -> (B, 1)."""
    B, dim = data.shape
    dim_pad = kparams["w1t"].shape[1]
    k = kparams["w1t"].shape[0]
    k2 = kparams["w2t"].shape[0]

    if tile_m is None:
        tile_m = _choose_tile_m(B)
    b_pad = _round_up(B, tile_m)
    num_tiles = b_pad // tile_m

    # Feature-major, bf16, zero-padded to a whole number of batch tiles.
    # TODO(synk): fuse this transpose/pad/cast into the upstream producer of
    # `data` (e.g. the generator output) to remove this extra HBM pass.
    x_t = jnp.zeros((dim_pad, b_pad), jnp.bfloat16).at[:dim, :B].set(
        data.T.astype(jnp.bfloat16))

    args = (x_t,
            kparams["w1t"], kparams["b1c"],
            kparams["w2t"], kparams["b2c"],
            kparams["w34"], kparams["b34"])

    def full(a):  # whole-array block, resident across the batch grid
        return pl.BlockSpec(a.shape, lambda i: (0, 0))

    in_specs = [pl.BlockSpec((dim_pad, tile_m), lambda i: (0, i))]
    in_specs += [full(a) for a in args[1:]]

    flops = 2 * b_pad * (dim_pad * k + k * k2 + k2)
    bytes_accessed = sum(int(a.size) * a.dtype.itemsize for a in args) + b_pad * 4

    out = pl.pallas_call(
        _discriminator_kernel,
        out_shape=jax.ShapeDtypeStruct((1, b_pad), jnp.float32),
        grid=(num_tiles,),
        in_specs=in_specs,
        out_specs=pl.BlockSpec((1, tile_m), lambda i: (0, i)),
        compiler_params=pltpu.CompilerParams(
            dimension_semantics=("parallel",),
            vmem_limit_bytes=VMEM_LIMIT_BYTES),
        cost_estimate=pl.CostEstimate(
            flops=flops, transcendentals=b_pad, bytes_accessed=bytes_accessed),
    )(*args)

    return out[0, :B].reshape(B, 1)


def init_params(key, dim, k):
    """PyTorch nn.Linear default init: U(-1/sqrt(fan_in), +1/sqrt(fan_in))."""
    def linear(key, fan_in, fan_out):
        kw, kb = jax.random.split(key)
        bound = 1.0 / np.sqrt(fan_in)
        w = jax.random.uniform(kw, (fan_in, fan_out), jnp.float32, -bound, bound)
        b = jax.random.uniform(kb, (1, fan_out), jnp.float32, -bound, bound)
        return w, b

    k1, k2, k3, k4 = jax.random.split(key, 4)
    w1, b1 = linear(k1, dim, k)
    w2, b2 = linear(k2, k, 2 * k)
    w3, b3 = linear(k3, 2 * k, 4 * k)
    w4, b4 = linear(k4, 4 * k, 1)
    return dict(w1=w1, b1=b1, w2=w2, b2=b2, w3=w3, b3=b3, w4=w4, b4=b4)


def reference_forward(data, p):
    h = data @ p["w1"] + p["b1"]
    h = jnp.where(h > 0, h, 0.01 * h)
    h = h @ p["w2"] + p["b2"]
    h = jnp.where(h > 0, h, 0.01 * h)
    h = h @ p["w3"] + p["b3"]
    logits = h @ p["w4"] + p["b4"]
    return jax.nn.sigmoid(logits)


if __name__ == "__main__":
    # Module config: dim_data_cat_list=[3, 5], dim_data_num=4  ->  dim = 12, k = 32
    dim_data_cat_list = [3, 5]
    dim_data_num = 4
    dim = dim_data_num + int(np.sum(dim_data_cat_list))
    k = 32

    key = jax.random.PRNGKey(0)
    kp, kx1, kx2 = jax.random.split(key, 3)
    params = init_params(kp, dim, k)
    kparams = prepare_params(params)

    fwd = jax.jit(discriminator_tabular_forward, static_argnames=("tile_m",))

    # Tiny batch (single grid tile, padded up to 128 lanes).
    data_small = jax.random.normal(kx1, (8, dim), jnp.float32)
    out_small = jax.block_until_ready(fwd(data_small, kparams))
    assert out_small.shape == (8, 1)
    ref_small = reference_forward(data_small, params)
    np.testing.assert_allclose(np.asarray(out_small), np.asarray(ref_small),
                               rtol=2e-2, atol=2e-2)

    # Larger batch with an explicit small tile to exercise the multi-tile grid
    # plus padding/slicing path.
    data_big = jax.random.normal(kx2, (1280, dim), jnp.float32)
    out_big = jax.block_until_ready(fwd(data_big, kparams, tile_m=256))
    assert out_big.shape == (1280, 1)
    ref_big = reference_forward(data_big, params)
    np.testing.assert_allclose(np.asarray(out_big), np.asarray(ref_big),
                               rtol=2e-2, atol=2e-2)

    # Default (large-tile) path on the bigger batch as well.
    out_big2 = jax.block_until_ready(fwd(data_big, kparams))
    np.testing.assert_allclose(np.asarray(out_big2), np.asarray(ref_big),
                               rtol=2e-2, atol=2e-2)

    print("KERNEL_OK")
</pallas_src>

<mosaic_0001>
module attributes {stable_mosaic.version = 11 : i64} {
  func.func @_discriminator_kernel(%arg0: i32, %arg1: memref<16x128xbf16, #tpu.memory_space<vmem>>, %arg2: memref<32x16xbf16, #tpu.memory_space<vmem>>, %arg3: memref<32x1xf32, #tpu.memory_space<vmem>>, %arg4: memref<64x32xbf16, #tpu.memory_space<vmem>>, %arg5: memref<64x1xf32, #tpu.memory_space<vmem>>, %arg6: memref<64x1xf32, #tpu.memory_space<vmem>>, %arg7: memref<1x1xf32, #tpu.memory_space<vmem>>, %arg8: memref<1x128xf32, #tpu.memory_space<vmem>>) attributes {dimension_semantics = [#tpu.dimension_semantics<parallel>], iteration_bounds = array<i64: 1>, scalar_prefetch = 0 : i64, scratch_operands = 0 : i64, tpu.core_type = #tpu.core_type<tc>, window_params = [{transform_indices = @transform_0, window_bounds = array<i64: 16, 128>}, {pipeline_mode = #tpu.pipeline_mode<synchronous>, transform_indices = @transform_1, window_bounds = array<i64: 32, 16>}, {pipeline_mode = #tpu.pipeline_mode<synchronous>, transform_indices = @transform_2, window_bounds = array<i64: 32, 1>}, {pipeline_mode = #tpu.pipeline_mode<synchronous>, transform_indices = @transform_3, window_bounds = array<i64: 64, 32>}, {pipeline_mode = #tpu.pipeline_mode<synchronous>, transform_indices = @transform_4, window_bounds = array<i64: 64, 1>}, {pipeline_mode = #tpu.pipeline_mode<synchronous>, transform_indices = @transform_5, window_bounds = array<i64: 64, 1>}, {pipeline_mode = #tpu.pipeline_mode<synchronous>, transform_indices = @transform_6, window_bounds = array<i64: 1, 1>}, {transform_indices = @transform_7, window_bounds = array<i64: 1, 128>}]} {
    %c0 = arith.constant 0 : index
    %c0_0 = arith.constant 0 : index
    %0 = vector.load %arg2[%c0, %c0_0] : memref<32x16xbf16, #tpu.memory_space<vmem>>, vector<32x16xbf16>
    %c0_1 = arith.constant 0 : index
    %c0_2 = arith.constant 0 : index
    %1 = vector.load %arg1[%c0_1, %c0_2] : memref<16x128xbf16, #tpu.memory_space<vmem>>, vector<16x128xbf16>
    %cst = arith.constant dense<0.000000e+00> : vector<32x128xf32>
    %2 = tpu.matmul %0, %1, %cst {dimension_numbers = #tpu.dot_dimension_numbers<[1], [0], [0], [1], [0, 0, 1, 1], [], []>} : vector<32x16xbf16>, vector<16x128xbf16>, vector<32x128xf32> -> vector<32x128xf32>
    %c0_3 = arith.constant 0 : index
    %c0_4 = arith.constant 0 : index
    %3 = vector.load %arg3[%c0_3, %c0_4] : memref<32x1xf32, #tpu.memory_space<vmem>>, vector<32x1xf32>
    %4 = vector.broadcast %3 : vector<32x1xf32> to vector<32x128xf32>
    %5 = arith.addf %2, %4 : vector<32x128xf32>
    %cst_5 = arith.constant 0.00999999977 : f32
    %6 = vector.broadcast %cst_5 : f32 to vector<32x128xf32>
    %7 = arith.mulf %6, %5 : vector<32x128xf32>
    %8 = arith.maximumf %5, %7 : vector<32x128xf32>
    %c0_6 = arith.constant 0 : index
    %c0_7 = arith.constant 0 : index
    %9 = vector.load %arg4[%c0_6, %c0_7] : memref<64x32xbf16, #tpu.memory_space<vmem>>, vector<64x32xbf16>
    %10 = arith.truncf %8 : vector<32x128xf32> to vector<32x128xbf16>
    %cst_8 = arith.constant dense<0.000000e+00> : vector<64x128xf32>
    %11 = tpu.matmul %9, %10, %cst_8 {dimension_numbers = #tpu.dot_dimension_numbers<[1], [0], [0], [1], [0, 0, 1, 1], [], []>} : vector<64x32xbf16>, vector<32x128xbf16>, vector<64x128xf32> -> vector<64x128xf32>
    %c0_9 = arith.constant 0 : index
    %c0_10 = arith.constant 0 : index
    %12 = vector.load %arg5[%c0_9, %c0_10] : memref<64x1xf32, #tpu.memory_space<vmem>>, vector<64x1xf32>
    %13 = vector.broadcast %12 : vector<64x1xf32> to vector<64x128xf32>
    %14 = arith.addf %11, %13 : vector<64x128xf32>
    %cst_11 = arith.constant 0.00999999977 : f32
    %15 = vector.broadcast %cst_11 : f32 to vector<64x128xf32>
    %16 = arith.mulf %15, %14 : vector<64x128xf32>
    %17 = arith.maximumf %14, %16 : vector<64x128xf32>
    %c0_12 = arith.constant 0 : index
    %c0_13 = arith.constant 0 : index
    %18 = vector.load %arg6[%c0_12, %c0_13] : memref<64x1xf32, #tpu.memory_space<vmem>>, vector<64x1xf32>
    %19 = vector.broadcast %18 : vector<64x1xf32> to vector<64x128xf32>
    %20 = arith.mulf %17, %19 : vector<64x128xf32>
    %cst_14 = arith.constant dense<0.000000e+00> : vector<128xf32>
    %21 = vector.multi_reduction <add>, %20, %cst_14 [0] : vector<64x128xf32> to vector<128xf32>
    %22 = vector.shape_cast %21 : vector<128xf32> to vector<1x128xf32>
    %c0_15 = arith.constant 0 : index
    %c0_16 = arith.constant 0 : index
    %23 = vector.load %arg7[%c0_15, %c0_16] : memref<1x1xf32, #tpu.memory_space<vmem>>, vector<1x1xf32>
    %24 = vector.broadcast %23 : vector<1x1xf32> to vector<1x128xf32>
    %25 = arith.addf %22, %24 : vector<1x128xf32>
    %cst_17 = arith.constant 0.000000e+00 : f32
    %26 = vector.broadcast %cst_17 : f32 to vector<1x128xf32>
    %27 = arith.subf %26, %25 : vector<1x128xf32>
    %28 = math.exp %27 : vector<1x128xf32>
    %cst_18 = arith.constant 1.000000e+00 : f32
    %29 = vector.broadcast %cst_18 : f32 to vector<1x128xf32>
    %30 = arith.addf %29, %28 : vector<1x128xf32>
    %cst_19 = arith.constant 1.000000e+00 : f32
    %31 = vector.broadcast %cst_19 : f32 to vector<1x128xf32>
    %32 = arith.divf %31, %30 : vector<1x128xf32>
    %c0_20 = arith.constant 0 : index
    %c0_21 = arith.constant 0 : index
    %33 = vector.load %arg8[%c0_20, %c0_21] : memref<1x128xf32, #tpu.memory_space<vmem>>, vector<1x128xf32>
    tpu.vector_store %arg8[%c0_20, %c0_21], %32 {strides = array<i32>} : memref<1x128xf32, #tpu.memory_space<vmem>>, vector<1x128xf32>,
    return
  }
  func.func @transform_0(%arg0: i32) -> (i32, i32) {
    %c0_i32 = arith.constant 0 : i32
    %c0_i32_0 = arith.constant 0 : i32
    return %c0_i32, %arg0 : i32, i32
  }
  func.func @transform_1(%arg0: i32) -> (i32, i32) {
    %c0_i32 = arith.constant 0 : i32
    %c0_i32_0 = arith.constant 0 : i32
    %c0_i32_1 = arith.constant 0 : i32
    return %c0_i32, %c0_i32_0 : i32, i32
  }
  func.func @transform_2(%arg0: i32) -> (i32, i32) {
    %c0_i32 = arith.constant 0 : i32
    %c0_i32_0 = arith.constant 0 : i32
    %c0_i32_1 = arith.constant 0 : i32
    return %c0_i32, %c0_i32_0 : i32, i32
  }
  func.func @transform_3(%arg0: i32) -> (i32, i32) {
    %c0_i32 = arith.constant 0 : i32
    %c0_i32_0 = arith.constant 0 : i32
    %c0_i32_1 = arith.constant 0 : i32
    return %c0_i32, %c0_i32_0 : i32, i32
  }
  func.func @transform_4(%arg0: i32) -> (i32, i32) {
    %c0_i32 = arith.constant 0 : i32
    %c0_i32_0 = arith.constant 0 : i32
    %c0_i32_1 = arith.constant 0 : i32
    return %c0_i32, %c0_i32_0 : i32, i32
  }
  func.func @transform_5(%arg0: i32) -> (i32, i32) {
    %c0_i32 = arith.constant 0 : i32
    %c0_i32_0 = arith.constant 0 : i32
    %c0_i32_1 = arith.constant 0 : i32
    return %c0_i32, %c0_i32_0 : i32, i32
  }
  func.func @transform_6(%arg0: i32) -> (i32, i32) {
    %c0_i32 = arith.constant 0 : i32
    %c0_i32_0 = arith.constant 0 : i32
    %c0_i32_1 = arith.constant 0 : i32
    return %c0_i32, %c0_i32_0 : i32, i32
  }
  func.func @transform_7(%arg0: i32) -> (i32, i32) {
    %c0_i32 = arith.constant 0 : i32
    %c0_i32_0 = arith.constant 0 : i32
    return %c0_i32, %arg0 : i32, i32
  }
}

</mosaic_0001>

<llo_original>
// kernel: discriminator_tabular_forward.1
$region0: #{discriminator_tabular_forward.1}
  #allocation0 [shape = 'u32[]', space=smem, size = 0x4, offset = 0x4, fixed_abs, tag = 'smem constant byte address 0x4 - core index']
  #allocation1 [shape = 'u32[144,128]{1,0:T(1,128)}', space=vmem, size = 0x12000, scoped, tag = 'internal scratch']
  #allocation2 [shape = 'f32[1,1]{1,0:T(1,128)S(1)}', space=vmem, size = 0x200, scoped, tag = 'scoped memory for discriminator_tabular_forward.1']
  %s0 = inlined_call_operand.vmem [shape: bf16[16,128], index: 0, kind: input, shape index: {}]
  %s1 = inlined_call_operand.vmem [shape: bf16[32,16], index: 1, kind: input, shape index: {}]
  %s2 = inlined_call_operand.vmem [shape: f32[32,1], index: 2, kind: input, shape index: {}]
  %s3 = inlined_call_operand.vmem [shape: bf16[64,32], index: 3, kind: input, shape index: {}]
  %s4 = inlined_call_operand.vmem [shape: f32[64,1], index: 4, kind: input, shape index: {}]
  %s5 = inlined_call_operand.vmem [shape: f32[64,1], index: 5, kind: input, shape index: {}]
  %s6 = inlined_call_operand.<no memory space> [shape: f32[1,1], index: 6, kind: input, shape index: {}]
  %s7 = inlined_call_operand.vmem [shape: f32[1,128], index: 7, kind: output, shape index: {}]
  %s8 = sld [smem:[#allocation0]]
  $region38: #{discriminator_tabular_forward.1} parent=0
    _
  %s10 = ssub.s32 1, %s8
  %s11 = scalar_select 0, %s10, %s8
  %v12 = vstv %s6
  %13 = vst [vmem:[#allocation2] sm:$0x1] %v12
  // Predicated region
  $region2: #{discriminator_tabular_forward.1} parent=0 // pred_check
    _
  $region3: #{discriminator_tabular_forward.1} parent=0 // pred_check_branch
    %15 = sbr.rel (0) target = $region5
  $region4: #{discriminator_tabular_forward.1} parent=0 // pred_region
    _
  $region5: #{discriminator_tabular_forward.1} parent=0 // pred_fallthru
    _
  // Predicated region
  $region6: #{discriminator_tabular_forward.1} parent=0 // pred_check
    _
  $region7: #{discriminator_tabular_forward.1} parent=0 // pred_check_branch
    %17 = sbr.rel (0) target = $region9
  $region8: #{discriminator_tabular_forward.1} parent=0 // pred_region
    _
  $region9: #{discriminator_tabular_forward.1} parent=0 // pred_fallthru
    _
  // Predicated region
  $region10: #{discriminator_tabular_forward.1} parent=0 // pred_check
    _
  $region11: #{discriminator_tabular_forward.1} parent=0 // pred_check_branch
    %19 = sbr.rel (0) target = $region13
  $region12: #{discriminator_tabular_forward.1} parent=0 // pred_region
    _
  $region13: #{discriminator_tabular_forward.1} parent=0 // pred_fallthru
    _
  // Predicated region
  $region14: #{discriminator_tabular_forward.1} parent=0 // pred_check
    _
  $region15: #{discriminator_tabular_forward.1} parent=0 // pred_check_branch
    %21 = sbr.rel (0) target = $region17
  $region16: #{discriminator_tabular_forward.1} parent=0 // pred_region
    _
  $region17: #{discriminator_tabular_forward.1} parent=0 // pred_fallthru
    _
  // Predicated region
  $region18: #{discriminator_tabular_forward.1} parent=0 // pred_check
    _
  $region19: #{discriminator_tabular_forward.1} parent=0 // pred_check_branch
    %23 = sbr.rel (0) target = $region21
  $region20: #{discriminator_tabular_forward.1} parent=0 // pred_region
    _
  $region21: #{discriminator_tabular_forward.1} parent=0 // pred_fallthru
    _
  // Predicated region
  $region22: #{discriminator_tabular_forward.1} parent=0 // pred_check
    _
  $region23: #{discriminator_tabular_forward.1} parent=0 // pred_check_branch
    %25 = sbr.rel (0) target = $region25
  $region24: #{discriminator_tabular_forward.1} parent=0 // pred_region
    _
  $region25: #{discriminator_tabular_forward.1} parent=0 // pred_fallthru
    _
  // Predicated region
  $region26: #{discriminator_tabular_forward.1} parent=0 // pred_check
    _
  $region27: #{discriminator_tabular_forward.1} parent=0 // pred_check_branch
    %27 = sbr.rel (0) target = $region29
  $region28: #{discriminator_tabular_forward.1} parent=0 // pred_region
    _
  $region29: #{discriminator_tabular_forward.1} parent=0 // pred_fallthru
    _
  %v29 = vld [vmem:[%s1] sm:$0xf]
  %v30 = vld [vmem:[%s1 + $0x4] sm:$0xf]
  %v31 = vld [vmem:[%s1 + $0x8] sm:$0xf]
  %v32 = vld [vmem:[%s1 + $0xc] sm:$0xf]
  %v33 = vld [vmem:[%s0] sm:$0xf]
  %v34 = vld [vmem:[%s0 + $0x4] sm:$0xf]
  %v35 = vld [vmem:[%s2] sm:$0xff]
  %v36 = vld [vmem:[%s2 + $0x8] sm:$0xff]
  %v37 = vld [vmem:[%s2 + $0x10] sm:$0xff]
  %v38 = vld [vmem:[%s2 + $0x18] sm:$0xff]
  %40 = vset.pattern.permute.xlu0 0
  %41 = vperm.xlu0 %40, %v35
  %v42 = vpop.permute.xlu0 %41
  %45 = vset.pattern.permute.xlu0 0
  %46 = vperm.xlu0 %45, %v36
  %v47 = vpop.permute.xlu0 %46
  %50 = vset.pattern.permute.xlu0 0
  %51 = vperm.xlu0 %50, %v37
  %v52 = vpop.permute.xlu0 %51
  %55 = vset.pattern.permute.xlu0 0
  %56 = vperm.xlu0 %55, %v38
  %v57 = vpop.permute.xlu0 %56
  %v63 = vunpack.c.l.b16 %v29
  %v64 = vunpack.c.l.b16 %v30
  %v65 = vunpack.c.l.b16 %v31
  %v66 = vunpack.c.l.b16 %v32
  %v67 = vpack.c.b16 %v64, %v63
  %v68 = vpack.c.b16 %v66, %v65
  %v71 = vunpack.c.l.b16 %v33
  %v72 = vunpack.c.l.b16 %v34
  %v73 = vpack.c.b16 %v72, %v71
  %vm75 = vcmask 130048
  %v77 = vsel %vm75, %v67, 0
  %v80 = vsel %vm75, %v68, 0
  %82 = vmatprep.subr.bf16.mxu0 0
  %83 = vmatpush1.bf16.msra.mxu0 %v73
  %84 = vmatprep.subr.bf16.mxu0 0
  %85 = vmatpush1.bf16.msra.mxu0 0
  %86 = vmatprep.subr.bf16.mxu0 0
  %87 = vmatpush1.bf16.msra.mxu0 0
  %88 = vmatprep.subr.bf16.mxu0 0
  %89 = vmatpush1.bf16.msra.mxu0 0
  %90 = vmatprep.subr.bf16.mxu0 0
  %91 = vmatpush1.bf16.msra.mxu0 0
  %92 = vmatprep.subr.bf16.mxu0 0
  %93 = vmatpush1.bf16.msra.mxu0 0
  %94 = vmatprep.subr.bf16.mxu0 0
  %95 = vmatpush1.bf16.msra.mxu0 0
  %96 = vmatprep.subr.bf16.mxu0 0
  %97 = vmatpush1.bf16.msra.mxu0 0
  %98 = vmatprep.subr.bf16.mxu0 0
  %99 = vmatpush1.bf16.msra.mxu0 0
  %100 = vmatprep.subr.bf16.mxu0 0
  %101 = vmatpush1.bf16.msra.mxu0 0
  %102 = vmatprep.subr.bf16.mxu0 0
  %103 = vmatpush1.bf16.msra.mxu0 0
  %104 = vmatprep.subr.bf16.mxu0 0
  %105 = vmatpush1.bf16.msra.mxu0 0
  %106 = vmatprep.subr.bf16.mxu0 0
  %107 = vmatpush1.bf16.msra.mxu0 0
  %108 = vmatprep.subr.bf16.mxu0 0
  %109 = vmatpush1.bf16.msra.mxu0 0
  %110 = vmatprep.subr.bf16.mxu0 0
  %111 = vmatpush1.bf16.msra.mxu0 0
  %112 = vmatprep.subr.bf16.mxu0 0
  %113 = vmatpush1.bf16.msra.mxu0 0
  %114 = vmatprep.mubr.bf16.mxu0 0
  %115 = vmatmul.mubr.bf16.gmra.mrb[0].mxu0 %v77
  %v116 = vpop.f32.mrb[0].mxu0
  %v117 = vadd.f32 %v42, %v116
  %v118 = vpop.f32.mrb[0].mxu0
  %v119 = vpop.f32.mrb[0].mxu0
  %v120 = vadd.f32 %v47, %v119
  %v121 = vpop.f32.mrb[0].mxu0
  %122 = vmatprep.mubr.bf16.mxu0 0
  %123 = vmatmul.mubr.bf16.gmra.mrb[0].mxu0 %v80
  %v124 = vpop.f32.mrb[0].mxu0
  %v125 = vadd.f32 %v52, %v124
  %v126 = vpop.f32.mrb[0].mxu0
  %v127 = vpop.f32.mrb[0].mxu0
  %v128 = vadd.f32 %v57, %v127
  %v129 = vpop.f32.mrb[0].mxu0
  %130 = vdwg.mxu0
  %v131 = vmul.f32 %v117, 0.01
  %v132 = vmul.f32 %v120, 0.01
  %v133 = vmul.f32 %v125, 0.01
  %v134 = vmul.f32 %v128, 0.01
  %v135 = vmax.f32 %v117, %v131
  %v136 = vmax.f32 %v120, %v132
  %v137 = vmax.f32 %v125, %v133
  %v138 = vmax.f32 %v128, %v134
  %v139 = vld [vmem:[%s3] sm:$0xf]
  %v140 = vld [vmem:[%s3 + $0x4] sm:$0xf]
  %v141 = vld [vmem:[%s3 + $0x8] sm:$0xf]
  %v142 = vld [vmem:[%s3 + $0xc] sm:$0xf]
  %v143 = vld [vmem:[%s3 + $0x10] sm:$0xf]
  %v144 = vld [vmem:[%s3 + $0x14] sm:$0xf]
  %v145 = vld [vmem:[%s3 + $0x18] sm:$0xf]
  %v146 = vld [vmem:[%s3 + $0x1c] sm:$0xf]
  %v147 = vpack.c.bf16 %v136, %v135
  %v148 = vpack.c.bf16 %v138, %v137
  %v149 = vld [vmem:[%s4] sm:$0xff]
  %v150 = vld [vmem:[%s4 + $0x8] sm:$0xff]
  %v151 = vld [vmem:[%s4 + $0x10] sm:$0xff]
  %v152 = vld [vmem:[%s4 + $0x18] sm:$0xff]
  %v153 = vld [vmem:[%s4 + $0x20] sm:$0xff]
  %v154 = vld [vmem:[%s4 + $0x28] sm:$0xff]
  %v155 = vld [vmem:[%s4 + $0x30] sm:$0xff]
  %v156 = vld [vmem:[%s4 + $0x38] sm:$0xff]
  %158 = vset.pattern.permute.xlu0 0
  %159 = vperm.xlu0 %158, %v149
  %v160 = vpop.permute.xlu0 %159
  %163 = vset.pattern.permute.xlu0 0
  %164 = vperm.xlu0 %163, %v150
  %v165 = vpop.permute.xlu0 %164
  %168 = vset.pattern.permute.xlu0 0
  %169 = vperm.xlu0 %168, %v151
  %v170 = vpop.permute.xlu0 %169
  %173 = vset.pattern.permute.xlu0 0
  %174 = vperm.xlu0 %173, %v152
  %v175 = vpop.permute.xlu0 %174
  %178 = vset.pattern.permute.xlu0 0
  %179 = vperm.xlu0 %178, %v153
  %v180 = vpop.permute.xlu0 %179
  %183 = vset.pattern.permute.xlu0 0
  %184 = vperm.xlu0 %183, %v154
  %v185 = vpop.permute.xlu0 %184
  %188 = vset.pattern.permute.xlu0 0
  %189 = vperm.xlu0 %188, %v155
  %v190 = vpop.permute.xlu0 %189
  %193 = vset.pattern.permute.xlu0 0
  %194 = vperm.xlu0 %193, %v156
  %v195 = vpop.permute.xlu0 %194
  %v205 = vunpack.c.l.b16 %v139
  %v206 = vunpack.c.l.b16 %v140
  %v207 = vunpack.c.l.b16 %v141
  %v208 = vunpack.c.l.b16 %v142
  %v209 = vunpack.c.l.b16 %v143
  %v210 = vunpack.c.l.b16 %v144
  %v211 = vunpack.c.l.b16 %v145
  %v212 = vunpack.c.l.b16 %v146
  %v213 = vpack.c.b16 %v206, %v205
  %v214 = vpack.c.b16 %v208, %v207
  %v215 = vpack.c.b16 %v210, %v209
  %v216 = vpack.c.b16 %v212, %v211
  %vm217 = vcmask 261120
  %v219 = vsel %vm217, %v213, 0
  %v222 = vsel %vm217, %v214, 0
  %v225 = vsel %vm217, %v215, 0
  %v228 = vsel %vm217, %v216, 0
  %230 = vmatprep.subr.bf16.mxu0 0
  %231 = vmatpush1.bf16.msra.mxu0 %v147
  %232 = vmatprep.subr.bf16.mxu0 0
  %233 = vmatpush1.bf16.msra.mxu0 %v148
  %234 = vmatprep.subr.bf16.mxu0 0
  %235 = vmatpush1.bf16.msra.mxu0 0
  %236 = vmatprep.subr.bf16.mxu0 0
  %237 = vmatpush1.bf16.msra.mxu0 0
  %238 = vmatprep.subr.bf16.mxu0 0
  %239 = vmatpush1.bf16.msra.mxu0 0
  %240 = vmatprep.subr.bf16.mxu0 0
  %241 = vmatpush1.bf16.msra.mxu0 0
  %242 = vmatprep.subr.bf16.mxu0 0
  %243 = vmatpush1.bf16.msra.mxu0 0
  %244 = vmatprep.subr.bf16.mxu0 0
  %245 = vmatpush1.bf16.msra.mxu0 0
  %246 = vmatprep.subr.bf16.mxu0 0
  %247 = vmatpush1.bf16.msra.mxu0 0
  %248 = vmatprep.subr.bf16.mxu0 0
  %249 = vmatpush1.bf16.msra.mxu0 0
  %250 = vmatprep.subr.bf16.mxu0 0
  %251 = vmatpush1.bf16.msra.mxu0 0
  %252 = vmatprep.subr.bf16.mxu0 0
  %253 = vmatpush1.bf16.msra.mxu0 0
  %254 = vmatprep.subr.bf16.mxu0 0
  %255 = vmatpush1.bf16.msra.mxu0 0
  %256 = vmatprep.subr.bf16.mxu0 0
  %257 = vmatpush1.bf16.msra.mxu0 0
  %258 = vmatprep.subr.bf16.mxu0 0
  %259 = vmatpush1.bf16.msra.mxu0 0
  %260 = vmatprep.subr.bf16.mxu0 0
  %261 = vmatpush1.bf16.msra.mxu0 0
  %262 = vmatprep.mubr.bf16.mxu0 0
  %263 = vmatmul.mubr.bf16.gmra.mrb[0].mxu0 %v219
  %v264 = vpop.f32.mrb[0].mxu0
  %v265 = vadd.f32 %v160, %v264
  %v266 = vpop.f32.mrb[0].mxu0
  %v267 = vpop.f32.mrb[0].mxu0
  %v268 = vadd.f32 %v165, %v267
  %v269 = vpop.f32.mrb[0].mxu0
  %270 = vmatprep.mubr.bf16.mxu0 0
  %271 = vmatmul.mubr.bf16.gmra.mrb[0].mxu0 %v222
  %v272 = vpop.f32.mrb[0].mxu0
  %v273 = vadd.f32 %v170, %v272
  %v274 = vpop.f32.mrb[0].mxu0
  %v275 = vpop.f32.mrb[0].mxu0
  %v276 = vadd.f32 %v175, %v275
  %v277 = vpop.f32.mrb[0].mxu0
  %278 = vmatprep.mubr.bf16.mxu0 0
  %279 = vmatmul.mubr.bf16.gmra.mrb[0].mxu0 %v225
  %v280 = vpop.f32.mrb[0].mxu0
  %v281 = vadd.f32 %v180, %v280
  %v282 = vpop.f32.mrb[0].mxu0
  %v283 = vpop.f32.mrb[0].mxu0
  %v284 = vadd.f32 %v185, %v283
  %v285 = vpop.f32.mrb[0].mxu0
  %286 = vmatprep.mubr.bf16.mxu0 0
  %287 = vmatmul.mubr.bf16.gmra.mrb[0].mxu0 %v228
  %v288 = vpop.f32.mrb[0].mxu0
  %v289 = vadd.f32 %v190, %v288
  %v290 = vpop.f32.mrb[0].mxu0
  %v291 = vpop.f32.mrb[0].mxu0
  %v292 = vadd.f32 %v195, %v291
  %v293 = vpop.f32.mrb[0].mxu0
  %294 = vdwg.mxu0
  %v295 = vmul.f32 %v265, 0.01
  %v296 = vmul.f32 %v268, 0.01
  %v297 = vmul.f32 %v273, 0.01
  %v298 = vmul.f32 %v276, 0.01
  %v299 = vmul.f32 %v281, 0.01
  %v300 = vmul.f32 %v284, 0.01
  %v301 = vmul.f32 %v289, 0.01
  %v302 = vmul.f32 %v292, 0.01
  %v303 = vmax.f32 %v265, %v295
  %v304 = vmax.f32 %v268, %v296
  %v305 = vmax.f32 %v273, %v297
  %v306 = vmax.f32 %v276, %v298
  %v307 = vmax.f32 %v281, %v299
  %v308 = vmax.f32 %v284, %v300
  %v309 = vmax.f32 %v289, %v301
  %v310 = vmax.f32 %v292, %v302
  %v311 = vld [vmem:[%s5] sm:$0xff]
  %v312 = vld [vmem:[%s5 + $0x8] sm:$0xff]
  %v313 = vld [vmem:[%s5 + $0x10] sm:$0xff]
  %v314 = vld [vmem:[%s5 + $0x18] sm:$0xff]
  %v315 = vld [vmem:[%s5 + $0x20] sm:$0xff]
  %v316 = vld [vmem:[%s5 + $0x28] sm:$0xff]
  %v317 = vld [vmem:[%s5 + $0x30] sm:$0xff]
  %v318 = vld [vmem:[%s5 + $0x38] sm:$0xff]
  %320 = vset.pattern.permute.xlu0 0
  %321 = vperm.xlu0 %320, %v311
  %v322 = vpop.permute.xlu0 %321
  %325 = vset.pattern.permute.xlu0 0
  %326 = vperm.xlu0 %325, %v312
  %v327 = vpop.permute.xlu0 %326
  %330 = vset.pattern.permute.xlu0 0
  %331 = vperm.xlu0 %330, %v313
  %v332 = vpop.permute.xlu0 %331
  %335 = vset.pattern.permute.xlu0 0
  %336 = vperm.xlu0 %335, %v314
  %v337 = vpop.permute.xlu0 %336
  %340 = vset.pattern.permute.xlu0 0
  %341 = vperm.xlu0 %340, %v315
  %v342 = vpop.permute.xlu0 %341
  %345 = vset.pattern.permute.xlu0 0
  %346 = vperm.xlu0 %345, %v316
  %v347 = vpop.permute.xlu0 %346
  %350 = vset.pattern.permute.xlu0 0
  %351 = vperm.xlu0 %350, %v317
  %v352 = vpop.permute.xlu0 %351
  %355 = vset.pattern.permute.xlu0 0
  %356 = vperm.xlu0 %355, %v318
  %v357 = vpop.permute.xlu0 %356
  %v359 = vmul.f32 %v303, %v322
  %v360 = vmul.f32 %v304, %v327
  %v361 = vmul.f32 %v305, %v332
  %v362 = vmul.f32 %v306, %v337
  %v363 = vmul.f32 %v307, %v342
  %v364 = vmul.f32 %v308, %v347
  %v365 = vmul.f32 %v309, %v352
  %v366 = vmul.f32 %v310, %v357
  %v367 = vadd.f32 %v359, %v360
  %v368 = vadd.f32 %v367, %v361
  %v369 = vadd.f32 %v368, %v362
  %v370 = vadd.f32 %v369, %v363
  %v371 = vadd.f32 %v370, %v364
  %v372 = vadd.f32 %v371, %v365
  %v373 = vadd.f32 %v372, %v366
  %v374 = vrot.slane %v373, 4
  %v375 = vadd.f32 %v373, %v374
  %v376 = vrot.slane %v375, 2
  %v377 = vadd.f32 %v375, %v376
  %v378 = vrot.slane %v377, 1
  %v379 = vadd.f32 %v377, %v378
  %v380 = vld [vmem:[#allocation2] sm:$0x1]
  %382 = vset.pattern.permute.xlu0 0
  %383 = vperm.xlu0 %382, %v380
  %v384 = vpop.permute.xlu0 %383
  %v386 = vlaneseq
  %v387 = vshrl.u32 %v386, 7
  %v388 = vsub.s32 0, %v387
  %v389 = vrot.slane %v384, %v388
  %v390 = vadd.f32 %v379, %v389
  %v391 = vsub.f32 0.0, %v390
  %v392 = vmul.f32 %v391, 1.442695
  %v393 = vpow.pop %v392
  %v394 = vadd.f32 %v393, 1.0
  %v395 = vrcp.pop %v394
  %v396 = vmul.f32 1.0, %v395
  %397 = vst [vmem:[%s7] sm:$0x1] %v396
  // Predicated region
  $region30: #{discriminator_tabular_forward.1} parent=0 // pred_check
    _
  $region31: #{discriminator_tabular_forward.1} parent=0 // pred_check_branch
    %399 = sbr.rel (0) target = $region33
  $region32: #{discriminator_tabular_forward.1} parent=0 // pred_region
    _
  $region33: #{discriminator_tabular_forward.1} parent=0 // pred_fallthru
    _
  // Predicated region
  $region34: #{discriminator_tabular_forward.1} parent=0 // pred_check
    _
  $region35: #{discriminator_tabular_forward.1} parent=0 // pred_check_branch
    %401 = sbr.rel (0) target = $region37
  $region36: #{discriminator_tabular_forward.1} parent=0 // pred_region
    _
  $region37: #{discriminator_tabular_forward.1} parent=0 // pred_fallthru
    _

</llo_original>
